<compile_context>
chip_gen: v7x
topology: tpu7x:2x2x1
jax: 0.10.0
libtpu: 0.0.40
codegen_flags: <defaults>
</compile_context>

<pallas_src>
import functools

import jax
import jax.numpy as jnp
from jax.experimental import pallas as pl
from jax.experimental.pallas import tpu as pltpu

EPS = 1e-8
_MiB = 1024 * 1024


def _round_up(a, b):
    return (a + b - 1) // b * b


def _tpu_vmem_capacity_bytes():
    """Physical VMEM per core; conservative 64 MiB fallback if undetectable."""
    try:
        cap = getattr(pltpu.get_tpu_info(), "vmem_capacity_bytes", None)
        if cap:
            return int(cap)
    except Exception:
        pass
    return 64 * _MiB


def _dsc_kernel(xa_ref, xb_ref, dw_ref, alpha_ref, pw_ref, bias_ref, o_ref,
                stat_ref, *cache_refs, dilation, n_valid_rows, inv_count,
                use_cache):
    """Grid = (M, phase, K-tiles).

    xa_ref:   (1, Kt, C_in)       current time tile (storage dtype, e.g. bf16)
    xb_ref:   (1, Hb, C_in)       halo rows from the next tile
    dw_ref:   (ksize, C_in)       depthwise taps (f32)
    alpha_ref:(1, 1)  SMEM        PReLU slope
    pw_ref:   (C_in, C_out_pad)   pointwise weight with gLN gamma folded in
    bias_ref: (1, C_out_pad)      beta @ W (f32)
    o_ref:    (1, Kt, C_out_pad)  output tile (storage dtype)
    stat_ref: SMEM (2,) f32       [sum(y), sum(y*y)] per batch element
    cache_refs[0] (optional): VMEM (T, Kt, C_in) depthwise+PReLU cache
    """
    phase = pl.program_id(1)
    kblk = pl.program_id(2)
    Kt = o_ref.shape[1]
    ksize = dw_ref.shape[0]

    def depthwise_prelu():
        xa = xa_ref[0].astype(jnp.float32)               # (Kt, C_in)
        xb = xb_ref[0].astype(jnp.float32)               # (Hb, C_in)
        xw = jnp.concatenate([xa, xb], axis=0)           # (Kt + Hb, C_in)
        # TODO(synk): if the bundle dump shows per-tap sublane-relayout copies
        # here, switch the shifted slices to pltpu.roll (XLU slot has slack).
        acc = xw[0:Kt, :] * dw_ref[0, :][None, :]
        for t in range(1, ksize):
            off = t * dilation
            acc = acc + xw[off:off + Kt, :] * dw_ref[t, :][None, :]
        alpha = alpha_ref[0, 0]
        return jnp.where(acc > 0, acc, alpha * acc)      # PReLU, f32

    def accumulate_stats(y):
        # Single-pass gLN statistics (sum, sum of squares), padded tail masked.
        # NOTE: E[y^2]-E[y]^2 in f32; switch to a shifted two-term accumulation
        # if gLN accuracy over very long K ever matters.
        @pl.when(kblk == 0)
        def _():
            stat_ref[0] = jnp.float32(0.0)
            stat_ref[1] = jnp.float32(0.0)

        row = kblk * Kt + jax.lax.broadcasted_iota(jnp.int32, (Kt, 1), 0)
        ym = jnp.where(row < n_valid_rows, y, 0.0)
        stat_ref[0] = stat_ref[0] + jnp.sum(ym)
        stat_ref[1] = stat_ref[1] + jnp.sum(ym * ym)

    def normalize_matmul(y):
        # gLN gamma/beta are already folded into pw_ref / bias_ref.
        mean = stat_ref[0] * inv_count
        var = stat_ref[1] * inv_count - mean * mean
        inv_std = jax.lax.rsqrt(jnp.maximum(var, 0.0) + EPS)
        yc = (y - mean).astype(pw_ref.dtype)             # MXU feed
        out = jnp.dot(yc, pw_ref[...], preferred_element_type=jnp.float32)
        o_ref[0] = (out * inv_std + bias_ref[...]).astype(o_ref.dtype)

    if use_cache:
        ycache_ref = cache_refs[0]

        @pl.when(phase == 0)
        def _():
            y = depthwise_prelu()
            ycache_ref[kblk] = y.astype(ycache_ref.dtype)
            accumulate_stats(y)

        @pl.when(phase == 1)
        def _():
            normalize_matmul(ycache_ref[kblk].astype(jnp.float32))
    else:
        y = depthwise_prelu()

        @pl.when(phase == 0)
        def _():
            accumulate_stats(y)

        @pl.when(phase == 1)
        def _():
            normalize_matmul(y)


def _pick_block_k(K_out, Hb, block_k, C_in, C_out_pad, x_bytes, w_bytes,
                  o_bytes, budget_bytes):
    """Time-tile rows: a multiple of Hb (halo-block offsets must divide Kt),
    shrunk until the per-step VMEM estimate fits the budget.  The Hb round-up
    happens *before* the check, so large dilations cannot blow the budget."""
    kt_cap = _round_up(max(K_out, Hb), Hb)
    kt = min(_round_up(max(block_k, Hb), Hb), kt_cap)

    def est(v):
        return (2 * 2 * v * C_in * x_bytes          # xa, double buffered
                + 2 * 2 * Hb * C_in * x_bytes       # halo block, double buffered
                + 2 * v * C_out_pad * o_bytes       # output block, double buffered
                + 2 * C_in * C_out_pad * w_bytes    # folded pointwise weight
                + 4 * (v + Hb) * C_in * 4           # f32 temporaries (xw/acc/y/yc)
                + v * C_out_pad * 4)                # f32 matmul result

    while kt > Hb and est(kt) > budget_bytes:
        kt = max(1, (kt // Hb) // 2) * Hb
    return kt


def depthwise_separable_conv_nwc(x_nwc, dw_w, alpha, gamma, beta, pw_w, *,
                                 kernel_size, dilation, padding,
                                 block_k=None, compute_dtype=jnp.bfloat16,
                                 out_dtype=None, use_vmem_cache=None):
    """Channels-last entry point. x_nwc: [M, K, C_in] -> [M, K_out, C_out]."""
    M, K, C_in = x_nwc.shape
    C_out = pw_w.shape[0]
    ksize = kernel_size
    halo = dilation * (ksize - 1)
    K_out = K + 2 * padding - halo
    assert K_out > 0
    if out_dtype is None:
        out_dtype = compute_dtype

    x_bytes = jnp.dtype(compute_dtype).itemsize
    o_bytes = jnp.dtype(out_dtype).itemsize

    C_out_pad = _round_up(C_out, 128)            # lane-dense output stores
    # sublane alignment: 8 for pure-f32 storage, 16 when any 2-byte dtype is stored
    sub = 8 if (x_bytes == 4 and o_bytes == 4) else 16
    Hb = _round_up(max(halo, sub), sub)          # halo block rows

    # --- generation-gated VMEM budgeting -------------------------------------
    vmem_cap = _tpu_vmem_capacity_bytes()
    if vmem_cap >= 100 * _MiB:                   # v5e / v6e: 128 MiB physical
        vmem_limit = 96 * _MiB
        default_kt = 2048
    else:                                        # v7x (64 MiB physical) / unknown
        vmem_limit = 48 * _MiB
        default_kt = 1024
    margin = 4 * _MiB
    if block_k is None:
        block_k = default_kt

    kt_cap = _round_up(max(K_out, Hb), Hb)
    cache_bound = (K_out + kt_cap) * C_in * x_bytes      # >= T*Kt*C_in*bytes
    if use_vmem_cache is None:
        use_cache = cache_bound <= (vmem_limit - margin) // 3
    else:
        use_cache = bool(use_vmem_cache)

    budget = vmem_limit - margin - (cache_bound if use_cache else 0)
    Kt = _pick_block_k(K_out, Hb, block_k, C_in, C_out_pad, x_bytes, x_bytes,
                       o_bytes, budget)
    T = (K_out + Kt - 1) // Kt
    Lpad = T * Kt + Hb                           # last halo block needs Hb rows only

    # storage cast + time padding (cast is a no-op if the caller already keeps
    # activations in compute_dtype, as a TCN stack should).
    # TODO(synk): fuse the edge-zero padding into the kernel (masked taps on the
    # first/last tile) so a stacked TCN never round-trips activations through
    # HBM just to pad them.
    xs = x_nwc if x_nwc.dtype == jnp.dtype(compute_dtype) else x_nwc.astype(compute_dtype)
    pad_hi = Lpad - padding - K
    if padding == 0 and pad_hi == 0:
        x_pad = xs
    else:
        x_pad = jnp.pad(xs, ((0, 0), (padding, pad_hi), (0, 0)))

    # depthwise taps: torch (C_in, 1, ksize) -> (ksize, C_in), kept f32
    dw_kc = jnp.transpose(dw_w[:, 0, :], (1, 0)).astype(jnp.float32)

    # fold gLN affine into the pointwise conv:
    #   (gamma*(y-mean)*inv_std + beta) @ W
    #     == ((y-mean) @ (gamma[:,None]*W)) * inv_std + beta @ W
    # NOTE: if a TCN block has both residual and skip 1x1 heads, fold them into
    # one [C_in, B+Sc] weight here (fills the 256-wide MXU on v6e/v7x).
    pw_t = jnp.transpose(pw_w[:, :, 0], (1, 0)).astype(jnp.float32)   # (C_in, C_out)
    w_fold = gamma.astype(jnp.float32)[:, None] * pw_t
    b_fold = beta.astype(jnp.float32) @ pw_t                          # (C_out,)
    w_fold = jnp.pad(w_fold, ((0, 0), (0, C_out_pad - C_out))).astype(compute_dtype)
    b_fold = jnp.pad(b_fold, (0, C_out_pad - C_out)).reshape(1, C_out_pad)
    b_fold = b_fold.astype(jnp.float32)
    # alpha stays an SMEM operand (not baked at trace time) so a learnable
    # PReLU slope keeps working under jit.
    alpha2 = jnp.reshape(alpha, (1, 1)).astype(jnp.float32)

    kern = functools.partial(_dsc_kernel, dilation=dilation,
                             n_valid_rows=K_out,
                             inv_count=1.0 / float(K_out * C_in),
                             use_cache=use_cache)

    xb_ratio = Kt // Hb
    if use_cache:
        # phase 1 reads the VMEM y-cache -> park the x blocks (no re-DMA).
        xa_map = lambda m, p, k: (m, (1 - p) * k, 0)
        xb_map = lambda m, p, k: (m, (1 - p) * (k + 1) * xb_ratio, 0)
    else:
        xa_map = lambda m, p, k: (m, k, 0)
        xb_map = lambda m, p, k: (m, (k + 1) * xb_ratio, 0)

    scratch_shapes = [pltpu.SMEM((2,), jnp.float32)]
    if use_cache:
        scratch_shapes.append(pltpu.VMEM((T, Kt, C_in), compute_dtype))

    read_passes = 1 if use_cache else 2
    cost = pl.CostEstimate(
        flops=int(2 * M * T * Kt * C_in * (C_out_pad + read_passes * ksize)),
        transcendentals=int(M * T),
        bytes_accessed=int(read_passes * M * Lpad * C_in * x_bytes
                           + M * T * Kt * C_out_pad * o_bytes
                           + C_in * C_out_pad * x_bytes))

    out_padded = pl.pallas_call(
        kern,
        out_shape=jax.ShapeDtypeStruct((M, T * Kt, C_out_pad), out_dtype),
        grid_spec=pltpu.PrefetchScalarGridSpec(
            num_scalar_prefetch=0,
            # (batch, phase: 0=stats+cache / 1=normalize+matmul, time tiles)
            grid=(M, 2, T),
            in_specs=[
                pl.BlockSpec((1, Kt, C_in), xa_map),
                pl.BlockSpec((1, Hb, C_in), xb_map),
                pl.BlockSpec((ksize, C_in), lambda m, p, k: (0, 0)),
                pl.BlockSpec(memory_space=pltpu.MemorySpace.SMEM),
                pl.BlockSpec((C_in, C_out_pad), lambda m, p, k: (0, 0)),
                pl.BlockSpec((1, C_out_pad), lambda m, p, k: (0, 0)),
            ],
            # Phase 0 parks on output block (m, 0) and never writes it; the
            # block index only changes after phase 1, k=0 has filled it, so no
            # garbage is ever flushed.  NOTE: this relies on Pallas' "write
            # back only when the block index changes" output semantics.
            out_specs=pl.BlockSpec((1, Kt, C_out_pad),
                                   lambda m, p, k: (m, p * k, 0)),
            scratch_shapes=scratch_shapes,
        ),
        compiler_params=pltpu.CompilerParams(
            # phase/k form a reduction over the gLN statistics -> "arbitrary";
            # only M feeds megacore.  TODO(synk): for tiny M on 2-TC parts
            # (v7x), split phase-1 time tiles across cores and combine the gLN
            # stats via a cross-core reduction.
            dimension_semantics=("parallel", "arbitrary", "arbitrary"),
            vmem_limit_bytes=int(vmem_limit)),
        cost_estimate=cost,
    )(x_pad, x_pad, dw_kc, alpha2, w_fold, b_fold)

    # TODO(synk): inside a TCN stack, hand the padded (T*Kt, C_out_pad) buffer
    # straight to the next layer instead of materializing this crop.
    return out_padded[:, :K_out, :C_out]


def depthwise_separable_conv(x, dw_w, alpha, gamma, beta, pw_w, *,
                             kernel_size, dilation, padding,
                             block_k=None, compute_dtype=jnp.bfloat16,
                             out_dtype=None, use_vmem_cache=None):
    """x: [M, C_in, K] (PyTorch NCW layout).  Returns [M, C_out, K_out]."""
    # Inside a TCN stack, keep activations in [M, K, C] (and in compute_dtype)
    # and call depthwise_separable_conv_nwc directly to skip these transposes.
    x_nwc = jnp.transpose(x, (0, 2, 1))
    out = depthwise_separable_conv_nwc(
        x_nwc, dw_w, alpha, gamma, beta, pw_w,
        kernel_size=kernel_size, dilation=dilation, padding=padding,
        block_k=block_k, compute_dtype=compute_dtype, out_dtype=out_dtype,
        use_vmem_cache=use_vmem_cache)
    return jnp.transpose(out, (0, 2, 1))


def reference_forward(x, dw_w, alpha, gamma, beta, pw_w, *, dilation, padding):
    """Pure-JAX reference mirroring the PyTorch module (NCW layout, gLN)."""
    C_in = x.shape[1]
    y = jax.lax.conv_general_dilated(
        x, dw_w,
        window_strides=(1,),
        padding=[(padding, padding)],
        rhs_dilation=(dilation,),
        dimension_numbers=("NCH", "OIH", "NCH"),
        feature_group_count=C_in)
    y = jnp.where(y > 0, y, alpha * y)                         # PReLU
    mean = jnp.mean(y, axis=(1, 2), keepdims=True)             # gLN
    var = jnp.mean((y - mean) ** 2, axis=(1, 2), keepdims=True)
    y = gamma[None, :, None] * (y - mean) / jnp.sqrt(var + EPS) + beta[None, :, None]
    return jnp.einsum("oc,mck->mok", pw_w[:, :, 0], y)         # pointwise 1x1


if __name__ == "__main__":
    # Small Conv-TasNet-like configuration; K=40 with block_k=16 forces several
    # time tiles (exercising the two-phase gLN, the VMEM y-cache indexing and
    # the masked last tile).
    M, C_in, C_out, K = 2, 32, 16, 40
    kernel_size, dilation = 3, 2
    padding = (kernel_size - 1) * dilation // 2                # non-causal "same"

    key = jax.random.PRNGKey(0)
    k0, k1, k2, k3, k4 = jax.random.split(key, 5)

    x = jax.random.normal(k0, (M, C_in, K), dtype=jnp.float32)
    dw_w = 0.1 * jax.random.normal(k1, (C_in, 1, kernel_size), dtype=jnp.float32)
    pw_w = 0.1 * jax.random.normal(k2, (C_out, C_in, 1), dtype=jnp.float32)
    alpha = jnp.float32(0.25)                                  # nn.PReLU default
    gamma = 1.0 + 0.1 * jax.random.normal(k3, (C_in,), dtype=jnp.float32)
    beta = 0.1 * jax.random.normal(k4, (C_in,), dtype=jnp.float32)

    ref = jax.block_until_ready(reference_forward(
        x, dw_w, alpha, gamma, beta, pw_w, dilation=dilation, padding=padding))

    # f32 path with the VMEM y-cache: tight semantic check of the tiled
    # two-phase gLN, folded weights and cached-y phase 1.
    out_f32 = depthwise_separable_conv(
        x, dw_w, alpha, gamma, beta, pw_w,
        kernel_size=kernel_size, dilation=dilation, padding=padding,
        block_k=16, compute_dtype=jnp.float32, out_dtype=jnp.float32,
        use_vmem_cache=True)
    out_f32 = jax.block_until_ready(out_f32)
    assert out_f32.shape == ref.shape == (M, C_out, K)
    err = float(jnp.max(jnp.abs(out_f32 - ref)))
    assert jnp.allclose(out_f32, ref, atol=1e-4, rtol=1e-4), \
        f"f32 cached path max abs err = {err}"

    # f32 recompute fallback (cache disabled) — covers the specialization used
    # for very long K on small-VMEM parts.
    out_nc = depthwise_separable_conv(
        x, dw_w, alpha, gamma, beta, pw_w,
        kernel_size=kernel_size, dilation=dilation, padding=padding,
        block_k=16, compute_dtype=jnp.float32, out_dtype=jnp.float32,
        use_vmem_cache=False)
    out_nc = jax.block_until_ready(out_nc)
    err_nc = float(jnp.max(jnp.abs(out_nc - ref)))
    assert jnp.allclose(out_nc, ref, atol=1e-4, rtol=1e-4), \
        f"f32 no-cache path max abs err = {err_nc}"

    # bf16 storage + bf16 MXU + bf16 output (production perf configuration).
    out_bf16 = depthwise_separable_conv(
        x, dw_w, alpha, gamma, beta, pw_w,
        kernel_size=kernel_size, dilation=dilation, padding=padding,
        block_k=16, compute_dtype=jnp.bfloat16)
    out_bf16 = jax.block_until_ready(out_bf16)
    assert out_bf16.dtype == jnp.bfloat16
    err_bf = float(jnp.max(jnp.abs(out_bf16.astype(jnp.float32) - ref)))
    assert jnp.allclose(out_bf16.astype(jnp.float32), ref, atol=5e-2, rtol=5e-2), \
        f"bf16 path max abs err = {err_bf}"

    print("KERNEL_OK")
</pallas_src>

<mosaic_0001>
module attributes {stable_mosaic.version = 11 : i64} {
  func.func @_dsc_kernel(%arg0: i32, %arg1: i32, %arg2: i32, %arg3: memref<1x16x32xf32, #tpu.memory_space<vmem>>, %arg4: memref<1x8x32xf32, #tpu.memory_space<vmem>>, %arg5: memref<3x32xf32, #tpu.memory_space<vmem>>, %arg6: memref<1x1xf32, #tpu.memory_space<smem>>, %arg7: memref<32x128xf32, #tpu.memory_space<vmem>>, %arg8: memref<1x128xf32, #tpu.memory_space<vmem>>, %arg9: memref<1x16x128xf32, #tpu.memory_space<vmem>>, %arg10: memref<2xf32, #tpu.memory_space<smem>>, %arg11: memref<3x16x32xf32, #tpu.memory_space<vmem>>) attributes {dimension_semantics = [#tpu.dimension_semantics<parallel>, #tpu.dimension_semantics<arbitrary>, #tpu.dimension_semantics<arbitrary>], iteration_bounds = array<i64: 2, 2, 3>, scalar_prefetch = 0 : i64, scratch_operands = 2 : i64, tpu.core_type = #tpu.core_type<tc>, window_params = [{transform_indices = @transform_0, window_bounds = array<i64: 1, 16, 32>}, {transform_indices = @transform_1, window_bounds = array<i64: 1, 8, 32>}, {pipeline_mode = #tpu.pipeline_mode<synchronous>, transform_indices = @transform_2, window_bounds = array<i64: 3, 32>}, {transform_indices = @transform_3, window_bounds = array<i64: 1, 1>}, {pipeline_mode = #tpu.pipeline_mode<synchronous>, transform_indices = @transform_4, window_bounds = array<i64: 32, 128>}, {pipeline_mode = #tpu.pipeline_mode<synchronous>, transform_indices = @transform_5, window_bounds = array<i64: 1, 128>}, {transform_indices = @transform_6, window_bounds = array<i64: 1, 16, 128>}]} {
    %c0_i32 = arith.constant 0 : i32
    %0 = arith.cmpi eq, %arg1, %c0_i32 : i32
    %1 = arith.extui %0 : i1 to i32
    %c0_i32_0 = arith.constant 0 : i32
    %2 = arith.cmpi ne, %1, %c0_i32_0 : i32
    scf.if %2 {
      %c0 = arith.constant 0 : index
      %c0_2 = arith.constant 0 : index
      %c0_3 = arith.constant 0 : index
      %6 = vector.load %arg3[%c0, %c0_2, %c0_3] : memref<1x16x32xf32, #tpu.memory_space<vmem>>, vector<1x16x32xf32>
      %7 = vector.shape_cast %6 : vector<1x16x32xf32> to vector<16x32xf32>
      %c0_4 = arith.constant 0 : index
      %c0_5 = arith.constant 0 : index
      %c0_6 = arith.constant 0 : index
      %8 = vector.load %arg4[%c0_4, %c0_5, %c0_6] : memref<1x8x32xf32, #tpu.memory_space<vmem>>, vector<1x8x32xf32>
      %9 = vector.shape_cast %8 : vector<1x8x32xf32> to vector<8x32xf32>
      %10 = tpu.concatenate %7, %9 in 0 : vector<16x32xf32>, vector<8x32xf32> -> vector<24x32xf32>
      %11 = vector.extract_strided_slice %10 {offsets = [0, 0], sizes = [16, 32], strides = [1, 1]} : vector<24x32xf32> to vector<16x32xf32>
      %c0_7 = arith.constant 0 : index
      %c0_8 = arith.constant 0 : index
      %12 = vector.load %arg5[%c0_7, %c0_8] : memref<3x32xf32, #tpu.memory_space<vmem>>, vector<1x32xf32>
      %13 = vector.shape_cast %12 : vector<1x32xf32> to vector<32xf32>
      %14 = vector.shape_cast %13 : vector<32xf32> to vector<1x32xf32>
      %15 = vector.broadcast %14 : vector<1x32xf32> to vector<16x32xf32>
      %16 = arith.mulf %11, %15 : vector<16x32xf32>
      %17 = vector.extract_strided_slice %10 {offsets = [2, 0], sizes = [16, 32], strides = [1, 1]} : vector<24x32xf32> to vector<16x32xf32>
      %c1 = arith.constant 1 : index
      %c0_9 = arith.constant 0 : index
      %18 = vector.load %arg5[%c1, %c0_9] : memref<3x32xf32, #tpu.memory_space<vmem>>, vector<1x32xf32>
      %19 = vector.shape_cast %18 : vector<1x32xf32> to vector<32xf32>
      %20 = vector.shape_cast %19 : vector<32xf32> to vector<1x32xf32>
      %21 = vector.broadcast %20 : vector<1x32xf32> to vector<16x32xf32>
      %22 = arith.mulf %17, %21 : vector<16x32xf32>
      %23 = arith.addf %16, %22 : vector<16x32xf32>
      %24 = vector.extract_strided_slice %10 {offsets = [4, 0], sizes = [16, 32], strides = [1, 1]} : vector<24x32xf32> to vector<16x32xf32>
      %c2 = arith.constant 2 : index
      %c0_10 = arith.constant 0 : index
      %25 = vector.load %arg5[%c2, %c0_10] : memref<3x32xf32, #tpu.memory_space<vmem>>, vector<1x32xf32>
      %26 = vector.shape_cast %25 : vector<1x32xf32> to vector<32xf32>
      %27 = vector.shape_cast %26 : vector<32xf32> to vector<1x32xf32>
      %28 = vector.broadcast %27 : vector<1x32xf32> to vector<16x32xf32>
      %29 = arith.mulf %24, %28 : vector<16x32xf32>
      %30 = arith.addf %23, %29 : vector<16x32xf32>
      %c0_11 = arith.constant 0 : index
      %c0_12 = arith.constant 0 : index
      %31 = memref.load %arg6[%c0_11, %c0_12] : memref<1x1xf32, #tpu.memory_space<smem>>
      %cst = arith.constant 0.000000e+00 : f32
      %32 = vector.broadcast %cst : f32 to vector<16x32xf32>
      %33 = arith.cmpf ogt, %30, %32 : vector<16x32xf32>
      %34 = vector.broadcast %31 : f32 to vector<16x32xf32>
      %35 = arith.mulf %34, %30 : vector<16x32xf32>
      %36 = arith.select %33, %30, %35 : vector<16x32xi1>, vector<16x32xf32>
      %37 = arith.index_cast %arg2 : i32 to index
      %c0_13 = arith.constant 0 : index
      %c0_14 = arith.constant 0 : index
      %38 = vector.load %arg11[%37, %c0_13, %c0_14] : memref<3x16x32xf32, #tpu.memory_space<vmem>>, vector<1x16x32xf32>
      %39 = vector.shape_cast %38 : vector<1x16x32xf32> to vector<16x32xf32>
      %40 = vector.shape_cast %36 : vector<16x32xf32> to vector<1x16x32xf32>
      tpu.vector_store %arg11[%37, %c0_13, %c0_14], %40 {strides = array<i32>} : memref<3x16x32xf32, #tpu.memory_space<vmem>>, vector<1x16x32xf32>,
      %c0_i32_15 = arith.constant 0 : i32
      %41 = arith.cmpi eq, %arg2, %c0_i32_15 : i32
      %42 = arith.extui %41 : i1 to i32
      %c0_i32_16 = arith.constant 0 : i32
      %43 = arith.cmpi ne, %42, %c0_i32_16 : i32
      scf.if %43 {
        %cst_24 = arith.constant 0.000000e+00 : f32
        %c0_25 = arith.constant 0 : index
        %69 = memref.load %arg10[%c0_25] : memref<2xf32, #tpu.memory_space<smem>>
        memref.store %cst_24, %arg10[%c0_25] : memref<2xf32, #tpu.memory_space<smem>>
        %cst_26 = arith.constant 0.000000e+00 : f32
        %c1_27 = arith.constant 1 : index
        %70 = memref.load %arg10[%c1_27] : memref<2xf32, #tpu.memory_space<smem>>
        memref.store %cst_26, %arg10[%c1_27] : memref<2xf32, #tpu.memory_space<smem>>
      } else {
      }
      %c16_i32 = arith.constant 16 : i32
      %44 = arith.muli %arg2, %c16_i32 : i32
      %45 = tpu.iota {dimensions = array<i32: 0>} : vector<16x1xi32>
      %46 = vector.broadcast %44 : i32 to vector<16x1xi32>
      %47 = arith.addi %46, %45 : vector<16x1xi32>
      %c40_i32 = arith.constant 40 : i32
      %48 = vector.broadcast %c40_i32 : i32 to vector<16x1xi32>
      %49 = arith.cmpi slt, %47, %48 : vector<16x1xi32>
      %cst_17 = arith.constant 0.000000e+00 : f32
      %50 = vector.shape_cast %49 : vector<16x1xi1> to vector<16x1xi1>
      %51 = vector.broadcast %50 : vector<16x1xi1> to vector<16x32xi1>
      %52 = vector.broadcast %cst_17 : f32 to vector<16x32xf32>
      %53 = arith.select %51, %36, %52 : vector<16x32xi1>, vector<16x32xf32>
      %c0_18 = arith.constant 0 : index
      %54 = memref.load %arg10[%c0_18] : memref<2xf32, #tpu.memory_space<smem>>
      %55 = vector.shape_cast %53 : vector<16x32xf32> to vector<1x16x32xf32>
      %cst_19 = arith.constant dense<0.000000e+00> : vector<1xf32>
      %56 = vector.multi_reduction <add>, %55, %cst_19 [1, 2] : vector<1x16x32xf32> to vector<1xf32>
      %57 = vector.shape_cast %56 : vector<1xf32> to vector<1x1x1xf32>
      %58 = vector.extract %57[0, 0, 0] : f32 from vector<1x1x1xf32>
      %59 = arith.addf %54, %58 : f32
      %c0_20 = arith.constant 0 : index
      %60 = memref.load %arg10[%c0_20] : memref<2xf32, #tpu.memory_space<smem>>
      memref.store %59, %arg10[%c0_20] : memref<2xf32, #tpu.memory_space<smem>>
      %c1_21 = arith.constant 1 : index
      %61 = memref.load %arg10[%c1_21] : memref<2xf32, #tpu.memory_space<smem>>
      %62 = arith.mulf %53, %53 : vector<16x32xf32>
      %63 = vector.shape_cast %62 : vector<16x32xf32> to vector<1x16x32xf32>
      %cst_22 = arith.constant dense<0.000000e+00> : vector<1xf32>
      %64 = vector.multi_reduction <add>, %63, %cst_22 [1, 2] : vector<1x16x32xf32> to vector<1xf32>
      %65 = vector.shape_cast %64 : vector<1xf32> to vector<1x1x1xf32>
      %66 = vector.extract %65[0, 0, 0] : f32 from vector<1x1x1xf32>
      %67 = arith.addf %61, %66 : f32
      %c1_23 = arith.constant 1 : index
      %68 = memref.load %arg10[%c1_23] : memref<2xf32, #tpu.memory_space<smem>>
      memref.store %67, %arg10[%c1_23] : memref<2xf32, #tpu.memory_space<smem>>
    } else {
    }
    %c1_i32 = arith.constant 1 : i32
    %3 = arith.cmpi eq, %arg1, %c1_i32 : i32
    %4 = arith.extui %3 : i1 to i32
    %c0_i32_1 = arith.constant 0 : i32
    %5 = arith.cmpi ne, %4, %c0_i32_1 : i32
    scf.if %5 {
      %6 = arith.index_cast %arg2 : i32 to index
      %c0 = arith.constant 0 : index
      %c0_2 = arith.constant 0 : index
      %7 = vector.load %arg11[%6, %c0, %c0_2] : memref<3x16x32xf32, #tpu.memory_space<vmem>>, vector<1x16x32xf32>
      %8 = vector.shape_cast %7 : vector<1x16x32xf32> to vector<16x32xf32>
      %c0_3 = arith.constant 0 : index
      %9 = memref.load %arg10[%c0_3] : memref<2xf32, #tpu.memory_space<smem>>
      %cst = arith.constant 7.812500e-04 : f32
      %10 = arith.mulf %9, %cst : f32
      %c1 = arith.constant 1 : index
      %11 = memref.load %arg10[%c1] : memref<2xf32, #tpu.memory_space<smem>>
      %cst_4 = arith.constant 7.812500e-04 : f32
      %12 = arith.mulf %11, %cst_4 : f32
      %13 = arith.mulf %10, %10 : f32
      %14 = arith.subf %12, %13 : f32
      %cst_5 = arith.constant 0.000000e+00 : f32
      %15 = arith.maximumf %14, %cst_5 : f32
      %cst_6 = arith.constant 9.99999993E-9 : f32
      %16 = arith.addf %15, %cst_6 : f32
      %17 = math.rsqrt %16 : f32
      %18 = vector.broadcast %10 : f32 to vector<16x32xf32>
      %19 = arith.subf %8, %18 : vector<16x32xf32>
      %c0_7 = arith.constant 0 : index
      %c0_8 = arith.constant 0 : index
      %20 = vector.load %arg7[%c0_7, %c0_8] : memref<32x128xf32, #tpu.memory_space<vmem>>, vector<32x128xf32>
      %cst_9 = arith.constant dense<0.000000e+00> : vector<16x128xf32>
      %21 = tpu.matmul %19, %20, %cst_9 {dimension_numbers = #tpu.dot_dimension_numbers<[1], [0], [0], [1], [0, 0, 1, 1], [], []>} : vector<16x32xf32>, vector<32x128xf32>, vector<16x128xf32> -> vector<16x128xf32>
      %22 = vector.broadcast %17 : f32 to vector<16x128xf32>
      %23 = arith.mulf %21, %22 : vector<16x128xf32>
      %c0_10 = arith.constant 0 : index
      %c0_11 = arith.constant 0 : index
      %24 = vector.load %arg8[%c0_10, %c0_11] : memref<1x128xf32, #tpu.memory_space<vmem>>, vector<1x128xf32>
      %25 = vector.broadcast %24 : vector<1x128xf32> to vector<16x128xf32>
      %26 = arith.addf %23, %25 : vector<16x128xf32>
      %c0_12 = arith.constant 0 : index
      %c0_13 = arith.constant 0 : index
      %c0_14 = arith.constant 0 : index
      %27 = vector.load %arg9[%c0_12, %c0_13, %c0_14] : memref<1x16x128xf32, #tpu.memory_space<vmem>>, vector<1x16x128xf32>
      %28 = vector.shape_cast %27 : vector<1x16x128xf32> to vector<16x128xf32>
      %29 = vector.shape_cast %26 : vector<16x128xf32> to vector<1x16x128xf32>
      tpu.vector_store %arg9[%c0_12, %c0_13, %c0_14], %29 {strides = array<i32>} : memref<1x16x128xf32, #tpu.memory_space<vmem>>, vector<1x16x128xf32>,
    } else {
    }
    return
  }
  func.func @transform_0(%arg0: i32, %arg1: i32, %arg2: i32) -> (i32, i32, i32) {
    %c1_i32 = arith.constant 1 : i32
    %0 = arith.subi %c1_i32, %arg1 : i32
    %1 = arith.muli %0, %arg2 : i32
    %c0_i32 = arith.constant 0 : i32
    %c0_i32_0 = arith.constant 0 : i32
    return %arg0, %1, %c0_i32 : i32, i32, i32
  }
  func.func @transform_1(%arg0: i32, %arg1: i32, %arg2: i32) -> (i32, i32, i32) {
    %c1_i32 = arith.constant 1 : i32
    %0 = arith.subi %c1_i32, %arg1 : i32
    %c1_i32_0 = arith.constant 1 : i32
    %1 = arith.addi %arg2, %c1_i32_0 : i32
    %2 = arith.muli %0, %1 : i32
    %c2_i32 = arith.constant 2 : i32
    %3 = arith.muli %2, %c2_i32 : i32
    %c0_i32 = arith.constant 0 : i32
    %c0_i32_1 = arith.constant 0 : i32
    return %arg0, %3, %c0_i32 : i32, i32, i32
  }
  func.func @transform_2(%arg0: i32, %arg1: i32, %arg2: i32) -> (i32, i32) {
    %c0_i32 = arith.constant 0 : i32
    %c0_i32_0 = arith.constant 0 : i32
    %c0_i32_1 = arith.constant 0 : i32
    return %c0_i32, %c0_i32_0 : i32, i32
  }
  func.func @transform_3(%arg0: i32, %arg1: i32, %arg2: i32) -> (i32, i32) {
    %c0_i32 = arith.constant 0 : i32
    %c0_i32_0 = arith.constant 0 : i32
    %c0_i32_1 = arith.constant 0 : i32
    return %c0_i32, %c0_i32_0 : i32, i32
  }
  func.func @transform_4(%arg0: i32, %arg1: i32, %arg2: i32) -> (i32, i32) {
    %c0_i32 = arith.constant 0 : i32
    %c0_i32_0 = arith.constant 0 : i32
    %c0_i32_1 = arith.constant 0 : i32
    return %c0_i32, %c0_i32_0 : i32, i32
  }
  func.func @transform_5(%arg0: i32, %arg1: i32, %arg2: i32) -> (i32, i32) {
    %c0_i32 = arith.constant 0 : i32
    %c0_i32_0 = arith.constant 0 : i32
    %c0_i32_1 = arith.constant 0 : i32
    return %c0_i32, %c0_i32_0 : i32, i32
  }
  func.func @transform_6(%arg0: i32, %arg1: i32, %arg2: i32) -> (i32, i32, i32) {
    %0 = arith.muli %arg1, %arg2 : i32
    %c0_i32 = arith.constant 0 : i32
    %c0_i32_0 = arith.constant 0 : i32
    return %arg0, %0, %c0_i32 : i32, i32, i32
  }
}

</mosaic_0001>

<llo_original>
// kernel: tpu_custom_call.1
$region0: #{tpu_custom_call.1}
  #allocation0 [shape = 'u32[]', space=smem, size = 0x4, offset = 0x4, fixed_abs, tag = 'smem constant byte address 0x4 - core index']
  #allocation1 [shape = 'u32[144,128]{1,0:T(1,128)}', space=vmem, size = 0x12000, scoped, tag = 'internal scratch']
  #allocation2 [shape = 'f32[2]{0:T(128)}', space=smem, size = 0x200, scoped, tag = 'scratch operand']
  #allocation3 [shape = 'f32[3,16,32]{2,1,0:T(8,128)}', space=vmem, size = 0x6000, scoped, tag = 'scratch operand']
  #allocation4 [shape = 'f32[1,1]{1,0:T(1,128)S(6)}', space=smem, size = 0x200, scoped, tag = 'scoped memory for tpu_custom_call.1']
  %s0 = inlined_call_operand.vmem [shape: f32[2,56,32], index: 0, kind: input, shape index: {}]
  %s1 = inlined_call_operand.vmem [shape: f32[2,56,32], index: 1, kind: input, shape index: {}]
  %s2 = inlined_call_operand.vmem [shape: f32[3,32], index: 2, kind: input, shape index: {}]
  %s3 = inlined_call_operand.<no memory space> [shape: f32[1,1], index: 3, kind: input, shape index: {}]
  %s4 = inlined_call_operand.vmem [shape: f32[32,128], index: 4, kind: input, shape index: {}]
  %s5 = inlined_call_operand.vmem [shape: f32[1,128], index: 5, kind: input, shape index: {}]
  %s6 = inlined_call_operand.hbm [shape: f32[2,48,128], index: 6, kind: output, shape index: {}]
  %s7 = sld [smem:[#allocation0]]
  $region69: #{tpu_custom_call.1} parent=0
    _
  %s9 = ssub.s32 1, %s7
  %s10 = scalar_select 0, %s9, %s7
  %11 = sst [smem:[#allocation4]] %s3
  $region1: #{tpu_custom_call.1} parent=0
    #allocation5 [shape = 'u8[16384]{0}', space=vmem, size = 0x4000, scoped, tag = 'output window, operand 0']
    #allocation6 [shape = 's32[2]{0}', space=sflag, size = 0x8, scoped, tag = 'scoped memory for tpu_custom_call.1']
    %12 = vsyncpa [#allocation6], 0
    %s13 = scalar_lea.sflag [#allocation6], 1
    %14 = vsyncpa %s13, 0
    loop: start=0, step=1, limit=14
    $region2: #{tpu_custom_call.1} parent=1 // loop_pre_header
      _
    $region3: #{tpu_custom_call.1} parent=1 // loop_header
      %s16 = sphi 0, %s20
      %p17 = scmp.ge.s32.totalorder %s16, 14
      %s23 = sphi 0, %s42
      %s24 = sphi 0, %s38
      %s25 = sphi 0, %s34
      %s26 = sphi 0, %s23
      %s27 = sphi 0, %s24
      %s28 = sphi 0, %s25
      %s29 = sphi 0, %s26
      %s30 = sphi 0, %s27
      %s31 = sphi 0, %s28
      %s51 = sphi 0, %s53
      %s54 = sphi 0, %s51
      %s55 = sphi 0, %s54
      %s71 = sphi 0, %s55
      %s87 = sphi 0, %s89
      %s90 = sphi 0, %s87
      %s91 = sphi 0, %s90
      %s107 = sphi 0, %s91
      %s111 = sphi 0, %s111
      %s113 = sphi 0, %s111
      %s114 = sphi 0, %s113
      %s128 = sphi 0, %s114
      %s132 = sphi 0, %s132
      %s134 = sphi 0, %s132
      %s135 = sphi 0, %s134
      %s149 = sphi 0, %s135
      %s153 = sphi 0, %s153
      %s155 = sphi 0, %s153
      %s156 = sphi 0, %s155
      %s170 = sphi 0, %s156
      %s174 = sphi 0, %s174
      %s176 = sphi 0, %s174
      %s177 = sphi 0, %s176
      %s191 = sphi 0, %s177
      %s201 = sphi 0, %s203
      %s204 = sphi 0, %s201
      %s205 = sphi 0, %s204
      %s221 = sphi 0, %s205
    $region4: #{tpu_custom_call.1} parent=1 // loop_header_branch
      %19 = sbr.rel (%p17) target = $region8
    $region5: #{tpu_custom_call.1} parent=1 // loop_body
      %s21 = ssub.s32 %s16, 1
      %s22 = ssub.s32 %s16, 2
      %s32 = sadd.s32 1, %s25
      %p33 = scmp.ge.s32.totalorder %s32, 3
      %s34 = scalar_select %p33, 0, %s32
      %s35 = sadd.s32 1, %s24
      %s36 = scalar_select %p33, %s35, %s24
      %p37 = scmp.ge.s32.totalorder %s36, 2
      %s38 = scalar_select %p37, 0, %s36
      %s39 = sadd.s32 1, %s23
      %s40 = scalar_select %p37, %s39, %s23
      %p41 = scmp.ge.s32.totalorder %s40, 2
      %s42 = scalar_select %p41, 0, %s40
      %s43 = ssub.s32 1, %s24
      %s44 = smul.u32 %s43, %s25
      %s45 = ssub.s32 1, %s38
      %s46 = smul.u32 %s45, %s34
      %s47 = ssub.s32 %s23, %s42
      %s48 = ssub.s32 %s44, %s46
      %s49 = sor.u32 %s47, %s48
      %p50 = scmp.eq.s32.totalorder %s49, 0
      %s52 = sadd.s32 %s51, 1
      %s53 = scalar_select %p50, %s51, %s52
      %p56 = pneg %p50
      %p57 = scmp.eq.s32.totalorder %s16, 11
      %p58 = por %p56, %p57
      %p59 = scmp.ne.s32.totalorder %s51, %s54
      %p60 = scmp.eq.s32.totalorder %s16, 0
      %p61 = por %p59, %p60
      %p62 = scmp.ne.s32.totalorder %s51, %s54
      %p63 = scmp.eq.s32.totalorder %s21, 11
      %p64 = por %p62, %p63
      %p65 = scmp.ne.s32.totalorder %s54, %s55
      %p66 = scmp.eq.s32.totalorder %s21, 0
      %p67 = por %p65, %p66
      %p68 = scmp.ne.s32.totalorder %s54, %s55
      %p69 = scmp.eq.s32.totalorder %s22, 11
      %p70 = por %p68, %p69
      %p72 = scmp.ne.s32.totalorder %s55, %s71
      %p73 = scmp.eq.s32.totalorder %s22, 0
      %p74 = por %p72, %p73
      %s75 = ssub.s32 1, %s24
      %s76 = sadd.s32 %s25, 1
      %s77 = smul.u32 %s75, %s76
      %s78 = smul.u32 %s77, 2
      %s79 = ssub.s32 1, %s38
      %s80 = sadd.s32 %s34, 1
      %s81 = smul.u32 %s79, %s80
      %s82 = smul.u32 %s81, 2
      %s83 = ssub.s32 %s23, %s42
      %s84 = ssub.s32 %s78, %s82
      %s85 = sor.u32 %s83, %s84
      %p86 = scmp.eq.s32.totalorder %s85, 0
      %s88 = sadd.s32 %s87, 1
      %s89 = scalar_select %p86, %s87, %s88
      %p92 = pneg %p86
      %p93 = scmp.eq.s32.totalorder %s16, 11
      %p94 = por %p92, %p93
      %p95 = scmp.ne.s32.totalorder %s87, %s90
      %p96 = scmp.eq.s32.totalorder %s16, 0
      %p97 = por %p95, %p96
      %p98 = scmp.ne.s32.totalorder %s87, %s90
      %p99 = scmp.eq.s32.totalorder %s21, 11
      %p100 = por %p98, %p99
      %p101 = scmp.ne.s32.totalorder %s90, %s91
      %p102 = scmp.eq.s32.totalorder %s21, 0
      %p103 = por %p101, %p102
      %p104 = scmp.ne.s32.totalorder %s90, %s91
      %p105 = scmp.eq.s32.totalorder %s22, 11
      %p106 = por %p104, %p105
      %p108 = scmp.ne.s32.totalorder %s91, %s107
      %p109 = scmp.eq.s32.totalorder %s22, 0
      %p110 = por %p108, %p109
      %s112 = sadd.s32 %s111, 1
      %p115 = scmp.eq.s32.totalorder %s16, 11
      %p116 = scmp.ne.s32.totalorder %s111, %s113
      %p117 = scmp.eq.s32.totalorder %s16, 0
      %p118 = por %p116, %p117
      %p119 = scmp.ne.s32.totalorder %s111, %s113
      %p120 = scmp.eq.s32.totalorder %s21, 11
      %p121 = por %p119, %p120
      %p122 = scmp.ne.s32.totalorder %s113, %s114
      %p123 = scmp.eq.s32.totalorder %s21, 0
      %p124 = por %p122, %p123
      %p125 = scmp.ne.s32.totalorder %s113, %s114
      %p126 = scmp.eq.s32.totalorder %s22, 11
      %p127 = por %p125, %p126
      %p129 = scmp.ne.s32.totalorder %s114, %s128
      %p130 = scmp.eq.s32.totalorder %s22, 0
      %p131 = por %p129, %p130
      %s133 = sadd.s32 %s132, 1
      %p136 = scmp.eq.s32.totalorder %s16, 11
      %p137 = scmp.ne.s32.totalorder %s132, %s134
      %p138 = scmp.eq.s32.totalorder %s16, 0
      %p139 = por %p137, %p138
      %p140 = scmp.ne.s32.totalorder %s132, %s134
      %p141 = scmp.eq.s32.totalorder %s21, 11
      %p142 = por %p140, %p141
      %p143 = scmp.ne.s32.totalorder %s134, %s135
      %p144 = scmp.eq.s32.totalorder %s21, 0
      %p145 = por %p143, %p144
      %p146 = scmp.ne.s32.totalorder %s134, %s135
      %p147 = scmp.eq.s32.totalorder %s22, 11
      %p148 = por %p146, %p147
      %p150 = scmp.ne.s32.totalorder %s135, %s149
      %p151 = scmp.eq.s32.totalorder %s22, 0
      %p152 = por %p150, %p151
      %s154 = sadd.s32 %s153, 1
      %p157 = scmp.eq.s32.totalorder %s16, 11
      %p158 = scmp.ne.s32.totalorder %s153, %s155
      %p159 = scmp.eq.s32.totalorder %s16, 0
      %p160 = por %p158, %p159
      %p161 = scmp.ne.s32.totalorder %s153, %s155
      %p162 = scmp.eq.s32.totalorder %s21, 11
      %p163 = por %p161, %p162
      %p164 = scmp.ne.s32.totalorder %s155, %s156
      %p165 = scmp.eq.s32.totalorder %s21, 0
      %p166 = por %p164, %p165
      %p167 = scmp.ne.s32.totalorder %s155, %s156
      %p168 = scmp.eq.s32.totalorder %s22, 11
      %p169 = por %p167, %p168
      %p171 = scmp.ne.s32.totalorder %s156, %s170
      %p172 = scmp.eq.s32.totalorder %s22, 0
      %p173 = por %p171, %p172
      %s175 = sadd.s32 %s174, 1
      %p178 = scmp.eq.s32.totalorder %s16, 11
      %p179 = scmp.ne.s32.totalorder %s174, %s176
      %p180 = scmp.eq.s32.totalorder %s16, 0
      %p181 = por %p179, %p180
      %p182 = scmp.ne.s32.totalorder %s174, %s176
      %p183 = scmp.eq.s32.totalorder %s21, 11
      %p184 = por %p182, %p183
      %p185 = scmp.ne.s32.totalorder %s176, %s177
      %p186 = scmp.eq.s32.totalorder %s21, 0
      %p187 = por %p185, %p186
      %p188 = scmp.ne.s32.totalorder %s176, %s177
      %p189 = scmp.eq.s32.totalorder %s22, 11
      %p190 = por %p188, %p189
      %p192 = scmp.ne.s32.totalorder %s177, %s191
      %p193 = scmp.eq.s32.totalorder %s22, 0
      %p194 = por %p192, %p193
      %s195 = smul.u32 %s24, %s25
      %s196 = smul.u32 %s38, %s34
      %s197 = ssub.s32 %s23, %s42
      %s198 = ssub.s32 %s195, %s196
      %s199 = sor.u32 %s197, %s198
      %p200 = scmp.eq.s32.totalorder %s199, 0
      %s202 = sadd.s32 %s201, 1
      %s203 = scalar_select %p200, %s201, %s202
      %p206 = pneg %p200
      %p207 = scmp.eq.s32.totalorder %s16, 11
      %p208 = por %p206, %p207
      %p209 = scmp.ne.s32.totalorder %s201, %s204
      %p210 = scmp.eq.s32.totalorder %s16, 0
      %p211 = por %p209, %p210
      %p212 = scmp.ne.s32.totalorder %s201, %s204
      %p213 = scmp.eq.s32.totalorder %s21, 11
      %p214 = por %p212, %p213
      %p215 = scmp.ne.s32.totalorder %s204, %s205
      %p216 = scmp.eq.s32.totalorder %s21, 0
      %p217 = por %p215, %p216
      %p218 = scmp.ne.s32.totalorder %s204, %s205
      %p219 = scmp.eq.s32.totalorder %s22, 11
      %p220 = por %p218, %p219
      %p222 = scmp.ne.s32.totalorder %s205, %s221
      %p223 = scmp.eq.s32.totalorder %s22, 0
      %p224 = por %p222, %p223
      %p225 = scmp.le.s32.totalorder 1, %s16
      %p226 = scmp.lt.s32.totalorder %s16, 13
      %p227 = pnand %p225, %p226
      %p228 = pneg %p227
      // Predicated region
      $region9: #{tpu_custom_call.1} parent=5 // pred_check
        _
      $region10: #{tpu_custom_call.1} parent=5 // pred_check_branch
        %230 = sbr.rel (%p227) target = $region12
      $region11: #{tpu_custom_call.1} parent=5 // pred_region
        %s231 = ssub.s32 %s16, 1
        // Predicated region
        $region13: #{tpu_custom_call.1} parent=11 // pred_check
          %p232 = pneg %p124
        $region14: #{tpu_custom_call.1} parent=11 // pred_check_branch
          %234 = sbr.rel (%p232) target = $region16
        $region15: #{tpu_custom_call.1} parent=11 // pred_region
          _
        $region16: #{tpu_custom_call.1} parent=11 // pred_fallthru
          _
        // Predicated region
        $region17: #{tpu_custom_call.1} parent=11 // pred_check
          %p235 = pneg %p145
        $region18: #{tpu_custom_call.1} parent=11 // pred_check_branch
          %237 = sbr.rel (%p235) target = $region20
        $region19: #{tpu_custom_call.1} parent=11 // pred_region
          _
        $region20: #{tpu_custom_call.1} parent=11 // pred_fallthru
          _
        // Predicated region
        $region21: #{tpu_custom_call.1} parent=11 // pred_check
          %p238 = pneg %p166
        $region22: #{tpu_custom_call.1} parent=11 // pred_check_branch
          %240 = sbr.rel (%p238) target = $region24
        $region23: #{tpu_custom_call.1} parent=11 // pred_region
          _
        $region24: #{tpu_custom_call.1} parent=11 // pred_fallthru
          _
        // Predicated region
        $region25: #{tpu_custom_call.1} parent=11 // pred_check
          %p241 = pneg %p187
        $region26: #{tpu_custom_call.1} parent=11 // pred_check_branch
          %243 = sbr.rel (%p241) target = $region28
        $region27: #{tpu_custom_call.1} parent=11 // pred_region
          _
        $region28: #{tpu_custom_call.1} parent=11 // pred_fallthru
          _
      $region12: #{tpu_custom_call.1} parent=5 // pred_fallthru
        _
      %p244 = scmp.lt.s32.totalorder %s16, 12
      // Predicated region
      $region29: #{tpu_custom_call.1} parent=5 // pred_check
        %p245 = pneg %p244
      $region30: #{tpu_custom_call.1} parent=5 // pred_check_branch
        %247 = sbr.rel (%p245) target = $region32
      $region31: #{tpu_custom_call.1} parent=5 // pred_region
        // Predicated region
        $region33: #{tpu_custom_call.1} parent=31 // pred_check
          %p248 = pneg %p61
        $region34: #{tpu_custom_call.1} parent=31 // pred_check_branch
          %250 = sbr.rel (%p248) target = $region36
        $region35: #{tpu_custom_call.1} parent=31 // pred_region
          %s251 = ssub.s32 1, %s24
          %s252 = smul.u32 %s251, %s25
          %s253 = smul.u32 2, %s252
          %s254 = ssub.s32 7, %s253
          %p255 = scmp.lt.s32.totalorder %s254, 2
          %s256 = scalar_select %p255, %s254, 2
          %s257 = smul.u32 128, %s256
          %p258 = scmp.lt.s32.totalorder %s23, 1
          %s259 = scalar_select %p258, %s23, 1
          %p260 = scmp.lt.s32.totalorder %s253, 6
          %s261 = scalar_select %p260, %s253, 6
          %s262 = smul.addr %s259, 7
          %s263 = sadd.s32 %s261, %s262
          %s264 = smul.addr %s263, 8
          %s265 = scalar_lea.vmem %s0, %s264
          %s266 = ssub.s32 1, %s24
          %s267 = smul.u32 %s266, %s25
          %s268 = smul.u32 2, %s267
          %s269 = ssub.s32 7, %s268
          %p270 = scmp.lt.s32.totalorder %s269, 2
          %s271 = scalar_select %p270, %s269, 2
          %s272 = smul.u32 128, %s271
        $region36: #{tpu_custom_call.1} parent=31 // pred_fallthru
          _
        // Predicated region
        $region37: #{tpu_custom_call.1} parent=31 // pred_check
          %p273 = pneg %p97
        $region38: #{tpu_custom_call.1} parent=31 // pred_check_branch
          %275 = sbr.rel (%p273) target = $region40
        $region39: #{tpu_custom_call.1} parent=31 // pred_region
          %s276 = ssub.s32 1, %s24
          %s277 = sadd.s32 %s25, 1
          %s278 = smul.u32 %s276, %s277
          %s279 = smul.u32 %s278, 2
          %p280 = scmp.lt.s32.totalorder %s23, 1
          %s281 = scalar_select %p280, %s23, 1
          %p282 = scmp.lt.s32.totalorder %s279, 6
          %s283 = scalar_select %p282, %s279, 6
          %s284 = smul.addr %s281, 7
          %s285 = sadd.s32 %s283, %s284
          %s286 = smul.addr %s285, 8
          %s287 = scalar_lea.vmem %s1, %s286
          %s288 = ssub.s32 1, %s24
          %s289 = sadd.s32 %s25, 1
          %s290 = smul.u32 %s288, %s289
          %s291 = smul.u32 %s290, 2
        $region40: #{tpu_custom_call.1} parent=31 // pred_fallthru
          _
      $region32: #{tpu_custom_call.1} parent=5 // pred_fallthru
        _
      %p292 = scmp.le.s32.totalorder 1, %s16
      %p293 = scmp.lt.s32.totalorder %s16, 13
      %p294 = pnand %p292, %p293
      %p295 = pneg %p294
      // Predicated region
      $region41: #{tpu_custom_call.1} parent=5 // pred_check
        _
      $region42: #{tpu_custom_call.1} parent=5 // pred_check_branch
        %297 = sbr.rel (%p294) target = $region44
      $region43: #{tpu_custom_call.1} parent=5 // pred_region
        %s298 = ssub.s32 %s16, 1
        %s299 = ssub.s32 1, %s27
        %s300 = smul.u32 %s299, %s28
        %s301 = smul.u32 2, %s300
        %s302 = ssub.s32 7, %s301
        %p303 = scmp.lt.s32.totalorder %s302, 2
        %s304 = scalar_select %p303, %s302, 2
        %s305 = smul.u32 128, %s304
        %p306 = scmp.lt.s32.totalorder %s26, 1
        %s307 = scalar_select %p306, %s26, 1
        %p308 = scmp.lt.s32.totalorder %s301, 6
        %s309 = scalar_select %p308, %s301, 6
        %s310 = smul.addr %s307, 7
        %s311 = sadd.s32 %s309, %s310
        %s312 = smul.addr %s311, 8
        %s313 = scalar_lea.vmem %s0, %s312
        %p314 = pneg %p67
        %p315 = pneg %p64
        %s316 = ssub.s32 1, %s27
        %s317 = sadd.s32 %s28, 1
        %s318 = smul.u32 %s316, %s317
        %s319 = smul.u32 %s318, 2
        %p320 = scmp.lt.s32.totalorder %s26, 1
        %s321 = scalar_select %p320, %s26, 1
        %p322 = scmp.lt.s32.totalorder %s319, 6
        %s323 = scalar_select %p322, %s319, 6
        %s324 = smul.addr %s321, 7
        %s325 = sadd.s32 %s323, %s324
        %s326 = smul.addr %s325, 8
        %s327 = scalar_lea.vmem %s1, %s326
        %p328 = pneg %p103
        %p329 = pneg %p100
        %p330 = pneg %p124
        %p331 = pneg %p121
        %p332 = pneg %p145
        %p333 = pneg %p142
        %p334 = pneg %p166
        %p335 = pneg %p163
        %p336 = pneg %p187
        %p337 = pneg %p184
        %p338 = pneg %p217
        %p339 = pneg %p214
        %s340 = sand.u32 %s204, 1
        %s341 = scalar_lea.sflag [#allocation6], %s340
        %s342 = sand.u32 %s204, 1
        %s343 = smul.addr %s342, 16
        %s344 = scalar_lea.vmem [#allocation5], %s343
        %s345 = ssub.s32 1, %s27
        %s346 = smul.u32 %s345, %s28
        %s347 = smul.u32 2, %s346
        %s348 = ssub.s32 7, %s347
        %p349 = scmp.lt.s32.totalorder %s348, 2
        %s350 = scalar_select %p349, %s348, 2
        %s351 = smul.u32 128, %s350
        %p352 = scmp.lt.s32.totalorder %s26, 1
        %s353 = scalar_select %p352, %s26, 1
        %p354 = scmp.lt.s32.totalorder %s347, 6
        %s355 = scalar_select %p354, %s347, 6
        %s356 = smul.addr %s353, 7
        %s357 = sadd.s32 %s355, %s356
        %s358 = smul.addr %s357, 8
        %s359 = scalar_lea.vmem %s0, %s358
        %s360 = ssub.s32 1, %s27
        %s361 = smul.u32 %s360, %s28
        %s362 = smul.u32 2, %s361
        %s363 = ssub.s32 7, %s362
        %p364 = scmp.lt.s32.totalorder %s363, 2
        %s365 = scalar_select %p364, %s363, 2
        %s366 = smul.u32 128, %s365
        %s367 = ssub.s32 1, %s27
        %s368 = sadd.s32 %s28, 1
        %s369 = smul.u32 %s367, %s368
        %s370 = smul.u32 %s369, 2
        %p371 = scmp.lt.s32.totalorder %s26, 1
        %s372 = scalar_select %p371, %s26, 1
        %p373 = scmp.lt.s32.totalorder %s370, 6
        %s374 = scalar_select %p373, %s370, 6
        %s375 = smul.addr %s372, 7
        %s376 = sadd.s32 %s374, %s375
        %s377 = smul.addr %s376, 8
        %s378 = scalar_lea.vmem %s1, %s377
        %s379 = ssub.s32 1, %s27
        %s380 = sadd.s32 %s28, 1
        %s381 = smul.u32 %s379, %s380
        %s382 = smul.u32 %s381, 2
        %s383 = smul.u32 %s27, %s28
        %s384 = smul.u32 2, %s383
        %p385 = scmp.eq.s32.totalorder %s27, 0
        // Predicated region
        $region45: #{tpu_custom_call.1} parent=43 // pred_check
          %p386 = pneg %p385
        $region46: #{tpu_custom_call.1} parent=43 // pred_check_branch
          %388 = sbr.rel (%p386) target = $region48
        $region47: #{tpu_custom_call.1} parent=43 // pred_region
          %v389 = vld [vmem:[%s359] sm:$0xff]
          %v390 = vld [vmem:[%s359 + $0x8] sm:$0xff]
          %v391 = vld [vmem:[%s378] sm:$0xff]
          %v392 = vld [vmem:[%s2] sm:$0x1]
          %v393 = vlaneseq
          %v394 = vshrl.u32 %v393, 7
          %v395 = vsub.s32 0, %v394
          %v396 = vrot.slane %v392, %v395
          %v397 = vmul.f32 %v389, %v396
          %v398 = vmul.f32 %v390, %v396
          %v399 = vld [vmem:[%s2 + $0x1] sm:$0x1]
          %v400 = vlaneseq
          %v401 = vshrl.u32 %v400, 7
          %v402 = vsub.s32 0, %v401
          %v403 = vrot.slane %v399, %v402
          %v404 = vmul.f32 %v389, %v403
          %v405 = vmul.f32 %v390, %v403
          %v406 = vmul.f32 %v391, %v403
          %vm410 = vcmask 1045504
          %v411 = vrot.slane %v404, 2
          %v412 = vrot.slane %v405, 2
          %v413 = vsel %vm410, %v411, %v412
          %v414 = vrot.slane %v406, 2
          %v415 = vsel %vm410, %v412, %v414
          %v418 = vadd.f32 %v397, %v413
          %v419 = vadd.f32 %v398, %v415
          %v420 = vld [vmem:[%s2 + $0x2] sm:$0x1]
          %v421 = vlaneseq
          %v422 = vshrl.u32 %v421, 7
          %v423 = vsub.s32 0, %v422
          %v424 = vrot.slane %v420, %v423
          %v425 = vmul.f32 %v389, %v424
          %v426 = vmul.f32 %v390, %v424
          %v427 = vmul.f32 %v391, %v424
          %vm431 = vcmask 1043456
          %v432 = vrot.slane %v425, 4
          %v433 = vrot.slane %v426, 4
          %v434 = vsel %vm431, %v432, %v433
          %v435 = vrot.slane %v427, 4
          %v436 = vsel %vm431, %v433, %v435
          %v439 = vadd.f32 %v418, %v434
          %v440 = vadd.f32 %v419, %v436
          %s441 = sld [smem:[#allocation4]]
          %vm442 = vcmp.gt.f32.partialorder %v439, 0.0
          %vm443 = vcmp.gt.f32.partialorder %v440, 0.0
          %v444 = vstv %s441
          %v445 = vmul.f32 %v444, %v439
          %v446 = vmul.f32 %v444, %v440
          %v447 = vsel %vm442, %v439, %v445
          %v448 = vsel %vm443, %v440, %v446
          %s449 = smul.u32 %s28, 16
          %s450 = scalar_lea.vmem [#allocation3], %s449
          %vm451 = vcmask 261120
          %452 = vst.msk [vmem:[%s450] sm:$0xff] %vm451, %v447
          %453 = vst.msk [vmem:[%s450 + $0x8] sm:$0xff] %vm451, %v448
          %p454 = scmp.eq.s32.totalorder %s28, 0
          // Predicated region
          $region49: #{tpu_custom_call.1} parent=47 // pred_check
            %p455 = pneg %p454
          $region50: #{tpu_custom_call.1} parent=47 // pred_check_branch
            %457 = sbr.rel (%p455) target = $region52
          $region51: #{tpu_custom_call.1} parent=47 // pred_region
            %s458 = scalar_lea.smem [#allocation2], 0
            %459 = sst [smem:[%s458]] 0.0
            %s460 = scalar_lea.smem [#allocation2], 1
            %461 = sst [smem:[%s460]] 0.0
          $region52: #{tpu_custom_call.1} parent=47 // pred_fallthru
            _
          %v462 = vlaneseq
          %v463 = vshrl.u32 %v462, 7
          %v464 = vadd.s32 %v463, 8
          %v465 = vstv %s449
          %v466 = vadd.s32 %v465, %v463
          %v467 = vadd.s32 %v465, %v464
          %vm468 = vcmp.lt.s32.totalorder %v466, 40
          %vm469 = vcmp.lt.s32.totalorder %v467, 40
          %v470 = vsel %vm468, 1, 0
          %v471 = vsel %vm469, 1, 0
          %vm472 = vcmp.eq.s32.totalorder %v470, 1
          %vm473 = vcmp.eq.s32.totalorder %v471, 1
          %v474 = vsel %vm472, %v447, 0.0
          %v475 = vsel %vm473, %v448, 0.0
          %s476 = sld [smem:[#allocation2]]
          %v477 = vsel %vm451, %v474, 0.0
          %v478 = vsel %vm451, %v475, 0.0
          %v479 = vadd.f32 %v477, %v478
          %480 = vadd.xlane.f32.xlu0 %v479
          %v481 = vpop.xlane.xlu0 %480
          %v482 = vrot.slane %v481, 4
          %v483 = vadd.f32 %v481, %v482
          %v484 = vrot.slane %v483, 2
          %v485 = vadd.f32 %v483, %v484
          %v486 = vrot.slane %v485, 1
          %v487 = vadd.f32 %v485, %v486
          %s488 = vtos %v487
          %s489 = sadd.f32 %s476, %s488
          %s490 = scalar_lea.smem [#allocation2], 0
          %491 = sst [smem:[%s490]] %s489
          %s492 = sld [smem:[#allocation2 + $0x1]]
          %v493 = vmul.f32 %v474, %v474
          %v494 = vmul.f32 %v475, %v475
          %v495 = vsel %vm451, %v493, 0.0
          %v496 = vsel %vm451, %v494, 0.0
          %v497 = vadd.f32 %v495, %v496
          %498 = vadd.xlane.f32.xlu0 %v497
          %v499 = vpop.xlane.xlu0 %498
          %v500 = vrot.slane %v499, 4
          %v501 = vadd.f32 %v499, %v500
          %v502 = vrot.slane %v501, 2
          %v503 = vadd.f32 %v501, %v502
          %v504 = vrot.slane %v503, 1
          %v505 = vadd.f32 %v503, %v504
          %s506 = vtos %v505
          %s507 = sadd.f32 %s492, %s506
          %s508 = scalar_lea.smem [#allocation2], 1
          %509 = sst [smem:[%s508]] %s507
        $region48: #{tpu_custom_call.1} parent=43 // pred_fallthru
          _
        %p510 = scmp.eq.s32.totalorder %s27, 1
        // Predicated region
        $region53: #{tpu_custom_call.1} parent=43 // pred_check
          %p511 = pneg %p510
        $region54: #{tpu_custom_call.1} parent=43 // pred_check_branch
          %513 = sbr.rel (%p511) target = $region56
        $region55: #{tpu_custom_call.1} parent=43 // pred_region
          %s514 = smul.u32 %s28, 16
          %s515 = scalar_lea.vmem [#allocation3], %s514
          %v516 = vld [vmem:[%s515] sm:$0xff]
          %v517 = vld [vmem:[%s515 + $0x8] sm:$0xff]
          %s518 = sld [smem:[#allocation2]]
          %s519 = smul.f32 %s518, 0.00078125
          %s520 = sld [smem:[#allocation2 + $0x1]]
          %s521 = smul.f32 %s520, 0.00078125
          %s522 = smul.f32 %s519, %s519
          %s523 = ssub.f32 %s521, %s522
          %s524 = smax.f32 %s523, 0.0
          %s525 = sadd.f32 %s524, 1e-08
          %v526 = vstv %s525
          %v527 = vrsqrt.pop %v526
          %s528 = vtos %v527
          %v529 = vstv %s519
          %v530 = vsub.f32 %v516, %v529
          %v531 = vsub.f32 %v517, %v529
          %v532 = vld [vmem:[%s4] sm:$0xff]
          %v533 = vld [vmem:[%s4 + $0x8] sm:$0xff]
          %v534 = vld [vmem:[%s4 + $0x10] sm:$0xff]
          %v535 = vld [vmem:[%s4 + $0x18] sm:$0xff]
          %vm536 = vcmask 261120
          %v538 = vsel %vm536, %v530, 0
          %v541 = vsel %vm536, %v531, 0
          %543 = vmatprep.subr.mxu0 0.0
          %544 = vmatpush1.msra.mxu0 %v532
          %545 = vmatprep.subr.mxu0 0.0
          %546 = vmatpush1.msra.mxu0 %v533
          %547 = vmatprep.subr.mxu0 0.0
          %548 = vmatpush1.msra.mxu0 %v534
          %549 = vmatprep.subr.mxu0 0.0
          %550 = vmatpush1.msra.mxu0 %v535
          %551 = vmatprep.subr.mxu0 0.0
          %552 = vmatpush1.msra.mxu0 0.0
          %553 = vmatprep.subr.mxu0 0.0
          %554 = vmatpush1.msra.mxu0 0.0
          %555 = vmatprep.subr.mxu0 0.0
          %556 = vmatpush1.msra.mxu0 0.0
          %557 = vmatprep.subr.mxu0 0.0
          %558 = vmatpush1.msra.mxu0 0.0
          %559 = vmatprep.subr.mxu0 0.0
          %560 = vmatpush1.msra.mxu0 0.0
          %561 = vmatprep.subr.mxu0 0.0
          %562 = vmatpush1.msra.mxu0 0.0
          %563 = vmatprep.subr.mxu0 0.0
          %564 = vmatpush1.msra.mxu0 0.0
          %565 = vmatprep.subr.mxu0 0.0
          %566 = vmatpush1.msra.mxu0 0.0
          %567 = vmatprep.subr.mxu0 0.0
          %568 = vmatpush1.msra.mxu0 0.0
          %569 = vmatprep.subr.mxu0 0.0
          %570 = vmatpush1.msra.mxu0 0.0
          %571 = vmatprep.subr.mxu0 0.0
          %572 = vmatpush1.msra.mxu0 0.0
          %573 = vmatprep.subr.mxu0 0.0
          %574 = vmatpush1.msra.mxu0 0.0
          %575 = vmatprep.subr.mxu0 0.0
          %576 = vmatpush1.msra.mxu0 0.0
          %577 = vmatprep.subr.mxu0 0.0
          %578 = vmatpush1.msra.mxu0 0.0
          %579 = vmatprep.subr.mxu0 0.0
          %580 = vmatpush1.msra.mxu0 0.0
          %581 = vmatprep.subr.mxu0 0.0
          %582 = vmatpush1.msra.mxu0 0.0
          %583 = vmatprep.subr.mxu0 0.0
          %584 = vmatpush1.msra.mxu0 0.0
          %585 = vmatprep.subr.mxu0 0.0
          %586 = vmatpush1.msra.mxu0 0.0
          %587 = vmatprep.subr.mxu0 0.0
          %588 = vmatpush1.msra.mxu0 0.0
          %589 = vmatprep.subr.mxu0 0.0
          %590 = vmatpush1.msra.mxu0 0.0
          %591 = vmatprep.subr.mxu0 0.0
          %592 = vmatpush1.msra.mxu0 0.0
          %593 = vmatprep.subr.mxu0 0.0
          %594 = vmatpush1.msra.mxu0 0.0
          %595 = vmatprep.subr.mxu0 0.0
          %596 = vmatpush1.msra.mxu0 0.0
          %597 = vmatprep.subr.mxu0 0.0
          %598 = vmatpush1.msra.mxu0 0.0
          %599 = vmatprep.subr.mxu0 0.0
          %600 = vmatpush1.msra.mxu0 0.0
          %601 = vmatprep.subr.mxu0 0.0
          %602 = vmatpush1.msra.mxu0 0.0
          %603 = vmatprep.subr.mxu0 0.0
          %604 = vmatpush1.msra.mxu0 0.0
          %605 = vmatprep.subr.mxu0 0.0
          %606 = vmatpush1.msra.mxu0 0.0
          %607 = vmatprep.mubr.f32.mxu0 0.0
          %608 = vmatmul.mubr.f32.gmra.mrb[0].mxu0 %v538
          %v609 = vpop.f32.mrb[0].mxu0
          %v610 = vadd.f32 0.0, %v609
          %v611 = vpop.f32.mrb[0].mxu0
          %612 = vmatprep.mubr.f32.mxu0 0.0
          %613 = vmatmul.mubr.f32.gmra.mrb[0].mxu0 %v541
          %v614 = vpop.f32.mrb[0].mxu0
          %v615 = vadd.f32 0.0, %v614
          %v616 = vpop.f32.mrb[0].mxu0
          %617 = vdwg.mxu0
          %v618 = vstv %s528
          %v619 = vmul.f32 %v610, %v618
          %v620 = vmul.f32 %v615, %v618
          %v621 = vld [vmem:[%s5] sm:$0x1]
          %v623 = vlaneseq
          %v624 = vshrl.u32 %v623, 7
          %v625 = vsub.s32 0, %v624
          %v626 = vrot.slane %v621, %v625
          %v628 = vadd.f32 %v619, %v626
          %v629 = vadd.f32 %v620, %v626
          %630 = vst [vmem:[%s344] sm:$0xff] %v628
          %631 = vst [vmem:[%s344 + $0x8] sm:$0xff] %v629
        $region56: #{tpu_custom_call.1} parent=43 // pred_fallthru
          _
        %s632 = sand.u32 %s204, 1
        %s633 = scalar_lea.sflag [#allocation6], %s632
        %s634 = sand.u32 %s204, 1
        %s635 = smul.addr %s634, 16
        %s636 = scalar_lea.vmem [#allocation5], %s635
        // Predicated region
        $region57: #{tpu_custom_call.1} parent=43 // pred_check
          %p637 = pneg %p214
        $region58: #{tpu_custom_call.1} parent=43 // pred_check_branch
          %639 = sbr.rel (%p637) target = $region60
        $region59: #{tpu_custom_call.1} parent=43 // pred_region
          %s640 = smul.u32 %s27, %s28
          %s641 = smul.u32 2, %s640
          %s643 = ssub.s32 256, 256
          %644 = vsyncadd %s633, %s643
          %s645 = smul.addr %s26, 6
          %s646 = sadd.s32 %s641, %s645
          %s647 = smul.addr %s646, 128
          %s648 = scalar_lea.hbm %s6, %s647
          %s649 = sshll.u32 %s636, 4
          %s650 = int_to_ptr.vmem [resolvable:$true] %s649
          %655 = dma.vmem_to_hbm [thread:$0]  %s650, 256, %s648, %s633, 128, 128, 8
        $region60: #{tpu_custom_call.1} parent=43 // pred_fallthru
          _
      $region44: #{tpu_custom_call.1} parent=5 // pred_fallthru
        _
      %p656 = scmp.le.s32.totalorder 2, %s16
      // Predicated region
      $region61: #{tpu_custom_call.1} parent=5 // pred_check
        %p657 = pneg %p656
      $region62: #{tpu_custom_call.1} parent=5 // pred_check_branch
        %659 = sbr.rel (%p657) target = $region64
      $region63: #{tpu_custom_call.1} parent=5 // pred_region
        %s660 = ssub.s32 %s16, 2
        // Predicated region
        $region65: #{tpu_custom_call.1} parent=63 // pred_check
          %p661 = pneg %p220
        $region66: #{tpu_custom_call.1} parent=63 // pred_check_branch
          %663 = sbr.rel (%p661) target = $region68
        $region67: #{tpu_custom_call.1} parent=63 // pred_region
          %s664 = sand.u32 %s205, 1
          %s665 = scalar_lea.sflag [#allocation6], %s664
          %s666 = sand.u32 %s205, 1
          %s667 = smul.addr %s666, 16
          %s668 = scalar_lea.vmem [#allocation5], %s667
          %669 = dma.done %s665, 256
        $region68: #{tpu_custom_call.1} parent=63 // pred_fallthru
          _
      $region64: #{tpu_custom_call.1} parent=5 // pred_fallthru
        _
    $region6: #{tpu_custom_call.1} parent=1 // loop_footer
      %s20 = sadd.s32 1, %s16
    $region7: #{tpu_custom_call.1} parent=1 // loop_footer_branch
      %15 = sbr.rel target = $region3
    $region8: #{tpu_custom_call.1} parent=1 // loop_exit
      _
    %670 = vsyncpa [#allocation6], 1
    %s671 = scalar_lea.sflag [#allocation6], 1
    %672 = vsyncpa %s671, 1

</llo_original>
